<compile_context>
chip_gen: v7x
topology: tpu7x:2x2x1
jax: 0.10.0
libtpu: 0.0.40
codegen_flags: <defaults>
</compile_context>

<pallas_src>
import jax
import jax.numpy as jnp
from jax.experimental import pallas as pl
from jax.experimental.pallas import tpu as pltpu


def mlp_critic_kernel(obs_ref, w1_ref, b1_ref, w2_ref, b2_ref, w3_ref, b3_ref,
                      out_ref):
    # obs_ref: (TILE_B, obs_dim), natural layout (possibly ragged last block;
    # garbage rows only contaminate their own batch lane and are masked on store).
    x = obs_ref[...]
    # Layer 1: fold the transpose into the matmul (NT dot on the MXU).
    #   (h1, obs_dim) @ (obs_dim, TILE_B) -> (h1, TILE_B)   -- batch on lanes
    h = jnp.dot(w1_ref[...], x.T, preferred_element_type=jnp.float32)
    h = jnp.tanh(h + b1_ref[...])
    # Layer 2: (h2, h1) @ (h1, TILE_B) -> (h2, TILE_B)
    h = jnp.dot(w2_ref[...], h, preferred_element_type=jnp.float32)
    h = jnp.tanh(h + b2_ref[...])
    # Output layer (identity activation): (1, h2) @ (h2, TILE_B) -> (1, TILE_B)
    v = jnp.dot(w3_ref[...], h, preferred_element_type=jnp.float32)
    out_ref[...] = (v + b3_ref[...]).astype(out_ref.dtype)


def _round_up(x, m):
    return ((x + m - 1) // m) * m


def _choose_tile_b(batch, tile_b):
    """Lane-dense batch tile: multiple of 128, big enough to amortize the
    ~0.35us per-grid-step overhead, no bigger than the (rounded-up) batch, and
    capped so the grid keeps >= 2 steps when possible (v7x has 2 TensorCores)."""
    b_ceil = _round_up(max(batch, 1), 128)
    t = min(_round_up(tile_b, 128), b_ceil)
    if b_ceil >= 2 * 128:
        t = min(t, _round_up(pl.cdiv(batch, 2), 128))
    return max(t, 128)


def mlp_critic_forward(obs, params, *, tile_b=8192):
    """Fused MLP critic forward. Returns shape (B,) like torch.squeeze(v, -1)."""
    w1, b1, w2, b2, w3, b3 = params
    B, obs_dim = obs.shape

    tile_b = _choose_tile_b(B, tile_b)
    grid = (pl.cdiv(B, tile_b),)            # ragged last block handled by Pallas

    full_block = lambda i: (0, 0)           # weights/biases resident across steps
    obs_block = lambda i: (i, 0)            # walk the batch (sublane) axis of obs
    out_block = lambda i: (0, i)            # batch on lanes for the output

    v = pl.pallas_call(
        mlp_critic_kernel,
        out_shape=jax.ShapeDtypeStruct((1, B), jnp.float32),
        grid=grid,
        in_specs=[
            pl.BlockSpec((tile_b, obs_dim), obs_block),
            pl.BlockSpec(w1.shape, full_block),
            pl.BlockSpec(b1.shape, full_block),
            pl.BlockSpec(w2.shape, full_block),
            pl.BlockSpec(b2.shape, full_block),
            pl.BlockSpec(w3.shape, full_block),
            pl.BlockSpec(b3.shape, full_block),
        ],
        out_specs=pl.BlockSpec((1, tile_b), out_block),
        compiler_params=pltpu.CompilerParams(
            dimension_semantics=("parallel",),   # shard batch over TCs (v7x)
            vmem_limit_bytes=32 * 1024 * 1024,   # safe on v5e/v6e/v7x at tile 8192
        ),
    )(obs, w1, b1, w2, b2, w3, b3)

    # Drop the size-1 output-feature dim (== torch.squeeze(v, -1)).
    return v[0]


def init_params(key, obs_dim, hidden_sizes):
    """Deterministic init mimicking nn.Linear default (U[-1/sqrt(fan_in), +1/sqrt(fan_in)]).
    Weights stored PyTorch-native (out_features, in_features); biases as (out_features, 1)."""
    sizes = [obs_dim] + list(hidden_sizes) + [1]
    params = []
    for j in range(len(sizes) - 1):
        fan_in, fan_out = sizes[j], sizes[j + 1]
        key, kw, kb = jax.random.split(key, 3)
        bound = 1.0 / jnp.sqrt(jnp.float32(fan_in))
        w = jax.random.uniform(kw, (fan_out, fan_in), jnp.float32, -bound, bound)
        b = jax.random.uniform(kb, (fan_out, 1), jnp.float32, -bound, bound)
        params += [w, b]
    return tuple(params)


if __name__ == "__main__":
    # B=200 exercises a 2-step grid (megacore cap) and a ragged last block.
    B, OBS_DIM = 200, 16
    HIDDEN = (32, 32)

    key = jax.random.PRNGKey(0)
    key, k_obs = jax.random.split(key)
    obs = jax.random.normal(k_obs, (B, OBS_DIM), jnp.float32)
    params = init_params(key, OBS_DIM, HIDDEN)

    v = mlp_critic_forward(obs, params)
    v = jax.block_until_ready(v)
    assert v.shape == (B,), v.shape

    # Pure-JAX reference (standard row-major math).
    w1, b1, w2, b2, w3, b3 = params
    ref = jnp.tanh(obs @ w1.T + b1.T)
    ref = jnp.tanh(ref @ w2.T + b2.T)
    ref = jnp.squeeze(ref @ w3.T + b3.T, -1)
    # Default TPU matmul precision feeds the MXU bf16-rounded inputs; the fused
    # kernel and the XLA reference may round intermediates slightly differently,
    # so tolerance is set to O(1e-3) (use Precision.HIGHEST for tighter parity).
    err = jnp.max(jnp.abs(v - ref))
    assert jnp.allclose(v, ref, atol=2e-3, rtol=2e-3), err

    print("KERNEL_OK")
</pallas_src>

<mosaic_0001>
module attributes {stable_mosaic.version = 11 : i64} {
  func.func @mlp_critic_kernel(%arg0: i32, %arg1: memref<128x16xf32, #tpu.memory_space<vmem>>, %arg2: memref<32x16xf32, #tpu.memory_space<vmem>>, %arg3: memref<32x1xf32, #tpu.memory_space<vmem>>, %arg4: memref<32x32xf32, #tpu.memory_space<vmem>>, %arg5: memref<32x1xf32, #tpu.memory_space<vmem>>, %arg6: memref<1x32xf32, #tpu.memory_space<vmem>>, %arg7: memref<1x1xf32, #tpu.memory_space<vmem>>, %arg8: memref<1x128xf32, #tpu.memory_space<vmem>>) attributes {dimension_semantics = [#tpu.dimension_semantics<parallel>], iteration_bounds = array<i64: 2>, scalar_prefetch = 0 : i64, scratch_operands = 0 : i64, tpu.core_type = #tpu.core_type<tc>, window_params = [{transform_indices = @transform_0, window_bounds = array<i64: 128, 16>}, {pipeline_mode = #tpu.pipeline_mode<synchronous>, transform_indices = @transform_1, window_bounds = array<i64: 32, 16>}, {pipeline_mode = #tpu.pipeline_mode<synchronous>, transform_indices = @transform_2, window_bounds = array<i64: 32, 1>}, {pipeline_mode = #tpu.pipeline_mode<synchronous>, transform_indices = @transform_3, window_bounds = array<i64: 32, 32>}, {pipeline_mode = #tpu.pipeline_mode<synchronous>, transform_indices = @transform_4, window_bounds = array<i64: 32, 1>}, {pipeline_mode = #tpu.pipeline_mode<synchronous>, transform_indices = @transform_5, window_bounds = array<i64: 1, 32>}, {pipeline_mode = #tpu.pipeline_mode<synchronous>, transform_indices = @transform_6, window_bounds = array<i64: 1, 1>}, {transform_indices = @transform_7, window_bounds = array<i64: 1, 128>}]} {
    %c0 = arith.constant 0 : index
    %c0_0 = arith.constant 0 : index
    %0 = vector.load %arg1[%c0, %c0_0] : memref<128x16xf32, #tpu.memory_space<vmem>>, vector<128x16xf32>
    %c0_1 = arith.constant 0 : index
    %c0_2 = arith.constant 0 : index
    %1 = vector.load %arg2[%c0_1, %c0_2] : memref<32x16xf32, #tpu.memory_space<vmem>>, vector<32x16xf32>
    %2 = tpu.transpose %0, [1, 0] : vector<128x16xf32> -> vector<16x128xf32>
    %cst = arith.constant dense<0.000000e+00> : vector<32x128xf32>
    %3 = tpu.matmul %1, %2, %cst {dimension_numbers = #tpu.dot_dimension_numbers<[1], [0], [0], [1], [0, 0, 1, 1], [], []>} : vector<32x16xf32>, vector<16x128xf32>, vector<32x128xf32> -> vector<32x128xf32>
    %c0_3 = arith.constant 0 : index
    %c0_4 = arith.constant 0 : index
    %4 = vector.load %arg3[%c0_3, %c0_4] : memref<32x1xf32, #tpu.memory_space<vmem>>, vector<32x1xf32>
    %5 = vector.broadcast %4 : vector<32x1xf32> to vector<32x128xf32>
    %6 = arith.addf %3, %5 : vector<32x128xf32>
    %7 = math.tanh %6 : vector<32x128xf32>
    %c0_5 = arith.constant 0 : index
    %c0_6 = arith.constant 0 : index
    %8 = vector.load %arg4[%c0_5, %c0_6] : memref<32x32xf32, #tpu.memory_space<vmem>>, vector<32x32xf32>
    %cst_7 = arith.constant dense<0.000000e+00> : vector<32x128xf32>
    %9 = tpu.matmul %8, %7, %cst_7 {dimension_numbers = #tpu.dot_dimension_numbers<[1], [0], [0], [1], [0, 0, 1, 1], [], []>} : vector<32x32xf32>, vector<32x128xf32>, vector<32x128xf32> -> vector<32x128xf32>
    %c0_8 = arith.constant 0 : index
    %c0_9 = arith.constant 0 : index
    %10 = vector.load %arg5[%c0_8, %c0_9] : memref<32x1xf32, #tpu.memory_space<vmem>>, vector<32x1xf32>
    %11 = vector.broadcast %10 : vector<32x1xf32> to vector<32x128xf32>
    %12 = arith.addf %9, %11 : vector<32x128xf32>
    %13 = math.tanh %12 : vector<32x128xf32>
    %c0_10 = arith.constant 0 : index
    %c0_11 = arith.constant 0 : index
    %14 = vector.load %arg6[%c0_10, %c0_11] : memref<1x32xf32, #tpu.memory_space<vmem>>, vector<1x32xf32>
    %cst_12 = arith.constant dense<0.000000e+00> : vector<1x128xf32>
    %15 = tpu.matmul %14, %13, %cst_12 {dimension_numbers = #tpu.dot_dimension_numbers<[1], [0], [0], [1], [0, 0, 1, 1], [], []>} : vector<1x32xf32>, vector<32x128xf32>, vector<1x128xf32> -> vector<1x128xf32>
    %c0_13 = arith.constant 0 : index
    %c0_14 = arith.constant 0 : index
    %16 = vector.load %arg7[%c0_13, %c0_14] : memref<1x1xf32, #tpu.memory_space<vmem>>, vector<1x1xf32>
    %17 = vector.broadcast %16 : vector<1x1xf32> to vector<1x128xf32>
    %18 = arith.addf %15, %17 : vector<1x128xf32>
    %c0_15 = arith.constant 0 : index
    %c0_16 = arith.constant 0 : index
    %19 = vector.load %arg8[%c0_15, %c0_16] : memref<1x128xf32, #tpu.memory_space<vmem>>, vector<1x128xf32>
    tpu.vector_store %arg8[%c0_15, %c0_16], %18 {strides = array<i32>} : memref<1x128xf32, #tpu.memory_space<vmem>>, vector<1x128xf32>,
    return
  }
  func.func @transform_0(%arg0: i32) -> (i32, i32) {
    %c0_i32 = arith.constant 0 : i32
    %c0_i32_0 = arith.constant 0 : i32
    return %arg0, %c0_i32 : i32, i32
  }
  func.func @transform_1(%arg0: i32) -> (i32, i32) {
    %c0_i32 = arith.constant 0 : i32
    %c0_i32_0 = arith.constant 0 : i32
    %c0_i32_1 = arith.constant 0 : i32
    return %c0_i32, %c0_i32_0 : i32, i32
  }
  func.func @transform_2(%arg0: i32) -> (i32, i32) {
    %c0_i32 = arith.constant 0 : i32
    %c0_i32_0 = arith.constant 0 : i32
    %c0_i32_1 = arith.constant 0 : i32
    return %c0_i32, %c0_i32_0 : i32, i32
  }
  func.func @transform_3(%arg0: i32) -> (i32, i32) {
    %c0_i32 = arith.constant 0 : i32
    %c0_i32_0 = arith.constant 0 : i32
    %c0_i32_1 = arith.constant 0 : i32
    return %c0_i32, %c0_i32_0 : i32, i32
  }
  func.func @transform_4(%arg0: i32) -> (i32, i32) {
    %c0_i32 = arith.constant 0 : i32
    %c0_i32_0 = arith.constant 0 : i32
    %c0_i32_1 = arith.constant 0 : i32
    return %c0_i32, %c0_i32_0 : i32, i32
  }
  func.func @transform_5(%arg0: i32) -> (i32, i32) {
    %c0_i32 = arith.constant 0 : i32
    %c0_i32_0 = arith.constant 0 : i32
    %c0_i32_1 = arith.constant 0 : i32
    return %c0_i32, %c0_i32_0 : i32, i32
  }
  func.func @transform_6(%arg0: i32) -> (i32, i32) {
    %c0_i32 = arith.constant 0 : i32
    %c0_i32_0 = arith.constant 0 : i32
    %c0_i32_1 = arith.constant 0 : i32
    return %c0_i32, %c0_i32_0 : i32, i32
  }
  func.func @transform_7(%arg0: i32) -> (i32, i32) {
    %c0_i32 = arith.constant 0 : i32
    %c0_i32_0 = arith.constant 0 : i32
    return %c0_i32, %arg0 : i32, i32
  }
}

</mosaic_0001>

<llo_original>
// kernel: tpu_custom_call.1
$region0: #{tpu_custom_call.1}
  #allocation0 [shape = 'u32[]', space=smem, size = 0x4, offset = 0x4, fixed_abs, tag = 'smem constant byte address 0x4 - core index']
  #allocation1 [shape = 'u32[144,128]{1,0:T(1,128)}', space=vmem, size = 0x12000, scoped, tag = 'internal scratch']
  #allocation2 [shape = 'f32[1,1]{1,0:T(1,128)S(1)}', space=vmem, size = 0x200, scoped, tag = 'scoped memory for tpu_custom_call.1']
  %s0 = inlined_call_operand.vmem [shape: f32[200,16], index: 0, kind: input, shape index: {}]
  %s1 = inlined_call_operand.vmem [shape: f32[32,16], index: 1, kind: input, shape index: {}]
  %s2 = inlined_call_operand.vmem [shape: f32[32,1], index: 2, kind: input, shape index: {}]
  %s3 = inlined_call_operand.vmem [shape: f32[32,32], index: 3, kind: input, shape index: {}]
  %s4 = inlined_call_operand.vmem [shape: f32[32,1], index: 4, kind: input, shape index: {}]
  %s5 = inlined_call_operand.vmem [shape: f32[1,32], index: 5, kind: input, shape index: {}]
  %s6 = inlined_call_operand.<no memory space> [shape: f32[1,1], index: 6, kind: input, shape index: {}]
  %s7 = inlined_call_operand.hbm [shape: f32[1,200], index: 7, kind: output, shape index: {}]
  %s8 = sld [smem:[#allocation0]]
  $region61: #{tpu_custom_call.1} parent=0
    _
  %s10 = ssub.s32 1, %s8
  %s11 = scalar_select 0, %s10, %s8
  %v12 = vstv %s6
  %13 = vst [vmem:[#allocation2] sm:$0x1] %v12
  $region1: #{tpu_custom_call.1} parent=0
    #allocation3 [shape = 'u8[1024]{0}', space=vmem, size = 0x400, scoped, tag = 'output window, operand 0']
    #allocation4 [shape = 's32[2]{0}', space=sflag, size = 0x8, scoped, tag = 'scoped memory for tpu_custom_call.1']
    %14 = vsyncpa [#allocation4], 0
    %s15 = scalar_lea.sflag [#allocation4], 1
    %16 = vsyncpa %s15, 0
    loop: start=0, step=1, limit=4
    $region2: #{tpu_custom_call.1} parent=1 // loop_pre_header
      _
    $region3: #{tpu_custom_call.1} parent=1 // loop_header
      %s18 = sphi 0, %s22
      %p19 = scmp.ge.s32.totalorder %s18, 4
      %s28 = sphi 0, %s30
      %s31 = sphi 0, %s28
      %s32 = sphi 0, %s31
      %s48 = sphi 0, %s32
      %s52 = sphi 0, %s52
      %s54 = sphi 0, %s52
      %s55 = sphi 0, %s54
      %s69 = sphi 0, %s55
      %s73 = sphi 0, %s73
      %s75 = sphi 0, %s73
      %s76 = sphi 0, %s75
      %s90 = sphi 0, %s76
      %s94 = sphi 0, %s94
      %s96 = sphi 0, %s94
      %s97 = sphi 0, %s96
      %s111 = sphi 0, %s97
      %s115 = sphi 0, %s115
      %s117 = sphi 0, %s115
      %s118 = sphi 0, %s117
      %s132 = sphi 0, %s118
      %s136 = sphi 0, %s136
      %s138 = sphi 0, %s136
      %s139 = sphi 0, %s138
      %s153 = sphi 0, %s139
      %s157 = sphi 0, %s157
      %s159 = sphi 0, %s157
      %s160 = sphi 0, %s159
      %s174 = sphi 0, %s160
      %s180 = sphi 0, %s182
      %s183 = sphi 0, %s180
      %s184 = sphi 0, %s183
      %s200 = sphi 0, %s184
    $region4: #{tpu_custom_call.1} parent=1 // loop_header_branch
      %21 = sbr.rel (%p19) target = $region8
    $region5: #{tpu_custom_call.1} parent=1 // loop_body
      %s23 = ssub.s32 %s18, 1
      %s24 = ssub.s32 %s18, 2
      %s25 = sadd.s32 %s18, 1
      %s26 = ssub.s32 %s18, %s25
      %p27 = scmp.eq.s32.totalorder %s26, 0
      %s29 = sadd.s32 %s28, 1
      %s30 = scalar_select %p27, %s28, %s29
      %p33 = pneg %p27
      %p34 = scmp.eq.s32.totalorder %s18, 1
      %p35 = por %p33, %p34
      %p36 = scmp.ne.s32.totalorder %s28, %s31
      %p37 = scmp.eq.s32.totalorder %s18, 0
      %p38 = por %p36, %p37
      %p39 = scmp.ne.s32.totalorder %s28, %s31
      %p40 = scmp.eq.s32.totalorder %s23, 1
      %p41 = por %p39, %p40
      %p42 = scmp.ne.s32.totalorder %s31, %s32
      %p43 = scmp.eq.s32.totalorder %s23, 0
      %p44 = por %p42, %p43
      %p45 = scmp.ne.s32.totalorder %s31, %s32
      %p46 = scmp.eq.s32.totalorder %s24, 1
      %p47 = por %p45, %p46
      %p49 = scmp.ne.s32.totalorder %s32, %s48
      %p50 = scmp.eq.s32.totalorder %s24, 0
      %p51 = por %p49, %p50
      %s53 = sadd.s32 %s52, 1
      %p56 = scmp.eq.s32.totalorder %s18, 1
      %p57 = scmp.ne.s32.totalorder %s52, %s54
      %p58 = scmp.eq.s32.totalorder %s18, 0
      %p59 = por %p57, %p58
      %p60 = scmp.ne.s32.totalorder %s52, %s54
      %p61 = scmp.eq.s32.totalorder %s23, 1
      %p62 = por %p60, %p61
      %p63 = scmp.ne.s32.totalorder %s54, %s55
      %p64 = scmp.eq.s32.totalorder %s23, 0
      %p65 = por %p63, %p64
      %p66 = scmp.ne.s32.totalorder %s54, %s55
      %p67 = scmp.eq.s32.totalorder %s24, 1
      %p68 = por %p66, %p67
      %p70 = scmp.ne.s32.totalorder %s55, %s69
      %p71 = scmp.eq.s32.totalorder %s24, 0
      %p72 = por %p70, %p71
      %s74 = sadd.s32 %s73, 1
      %p77 = scmp.eq.s32.totalorder %s18, 1
      %p78 = scmp.ne.s32.totalorder %s73, %s75
      %p79 = scmp.eq.s32.totalorder %s18, 0
      %p80 = por %p78, %p79
      %p81 = scmp.ne.s32.totalorder %s73, %s75
      %p82 = scmp.eq.s32.totalorder %s23, 1
      %p83 = por %p81, %p82
      %p84 = scmp.ne.s32.totalorder %s75, %s76
      %p85 = scmp.eq.s32.totalorder %s23, 0
      %p86 = por %p84, %p85
      %p87 = scmp.ne.s32.totalorder %s75, %s76
      %p88 = scmp.eq.s32.totalorder %s24, 1
      %p89 = por %p87, %p88
      %p91 = scmp.ne.s32.totalorder %s76, %s90
      %p92 = scmp.eq.s32.totalorder %s24, 0
      %p93 = por %p91, %p92
      %s95 = sadd.s32 %s94, 1
      %p98 = scmp.eq.s32.totalorder %s18, 1
      %p99 = scmp.ne.s32.totalorder %s94, %s96
      %p100 = scmp.eq.s32.totalorder %s18, 0
      %p101 = por %p99, %p100
      %p102 = scmp.ne.s32.totalorder %s94, %s96
      %p103 = scmp.eq.s32.totalorder %s23, 1
      %p104 = por %p102, %p103
      %p105 = scmp.ne.s32.totalorder %s96, %s97
      %p106 = scmp.eq.s32.totalorder %s23, 0
      %p107 = por %p105, %p106
      %p108 = scmp.ne.s32.totalorder %s96, %s97
      %p109 = scmp.eq.s32.totalorder %s24, 1
      %p110 = por %p108, %p109
      %p112 = scmp.ne.s32.totalorder %s97, %s111
      %p113 = scmp.eq.s32.totalorder %s24, 0
      %p114 = por %p112, %p113
      %s116 = sadd.s32 %s115, 1
      %p119 = scmp.eq.s32.totalorder %s18, 1
      %p120 = scmp.ne.s32.totalorder %s115, %s117
      %p121 = scmp.eq.s32.totalorder %s18, 0
      %p122 = por %p120, %p121
      %p123 = scmp.ne.s32.totalorder %s115, %s117
      %p124 = scmp.eq.s32.totalorder %s23, 1
      %p125 = por %p123, %p124
      %p126 = scmp.ne.s32.totalorder %s117, %s118
      %p127 = scmp.eq.s32.totalorder %s23, 0
      %p128 = por %p126, %p127
      %p129 = scmp.ne.s32.totalorder %s117, %s118
      %p130 = scmp.eq.s32.totalorder %s24, 1
      %p131 = por %p129, %p130
      %p133 = scmp.ne.s32.totalorder %s118, %s132
      %p134 = scmp.eq.s32.totalorder %s24, 0
      %p135 = por %p133, %p134
      %s137 = sadd.s32 %s136, 1
      %p140 = scmp.eq.s32.totalorder %s18, 1
      %p141 = scmp.ne.s32.totalorder %s136, %s138
      %p142 = scmp.eq.s32.totalorder %s18, 0
      %p143 = por %p141, %p142
      %p144 = scmp.ne.s32.totalorder %s136, %s138
      %p145 = scmp.eq.s32.totalorder %s23, 1
      %p146 = por %p144, %p145
      %p147 = scmp.ne.s32.totalorder %s138, %s139
      %p148 = scmp.eq.s32.totalorder %s23, 0
      %p149 = por %p147, %p148
      %p150 = scmp.ne.s32.totalorder %s138, %s139
      %p151 = scmp.eq.s32.totalorder %s24, 1
      %p152 = por %p150, %p151
      %p154 = scmp.ne.s32.totalorder %s139, %s153
      %p155 = scmp.eq.s32.totalorder %s24, 0
      %p156 = por %p154, %p155
      %s158 = sadd.s32 %s157, 1
      %p161 = scmp.eq.s32.totalorder %s18, 1
      %p162 = scmp.ne.s32.totalorder %s157, %s159
      %p163 = scmp.eq.s32.totalorder %s18, 0
      %p164 = por %p162, %p163
      %p165 = scmp.ne.s32.totalorder %s157, %s159
      %p166 = scmp.eq.s32.totalorder %s23, 1
      %p167 = por %p165, %p166
      %p168 = scmp.ne.s32.totalorder %s159, %s160
      %p169 = scmp.eq.s32.totalorder %s23, 0
      %p170 = por %p168, %p169
      %p171 = scmp.ne.s32.totalorder %s159, %s160
      %p172 = scmp.eq.s32.totalorder %s24, 1
      %p173 = por %p171, %p172
      %p175 = scmp.ne.s32.totalorder %s160, %s174
      %p176 = scmp.eq.s32.totalorder %s24, 0
      %p177 = por %p175, %p176
      %s178 = ssub.s32 %s18, %s25
      %p179 = scmp.eq.s32.totalorder %s178, 0
      %s181 = sadd.s32 %s180, 1
      %s182 = scalar_select %p179, %s180, %s181
      %p185 = pneg %p179
      %p186 = scmp.eq.s32.totalorder %s18, 1
      %p187 = por %p185, %p186
      %p188 = scmp.ne.s32.totalorder %s180, %s183
      %p189 = scmp.eq.s32.totalorder %s18, 0
      %p190 = por %p188, %p189
      %p191 = scmp.ne.s32.totalorder %s180, %s183
      %p192 = scmp.eq.s32.totalorder %s23, 1
      %p193 = por %p191, %p192
      %p194 = scmp.ne.s32.totalorder %s183, %s184
      %p195 = scmp.eq.s32.totalorder %s23, 0
      %p196 = por %p194, %p195
      %p197 = scmp.ne.s32.totalorder %s183, %s184
      %p198 = scmp.eq.s32.totalorder %s24, 1
      %p199 = por %p197, %p198
      %p201 = scmp.ne.s32.totalorder %s184, %s200
      %p202 = scmp.eq.s32.totalorder %s24, 0
      %p203 = por %p201, %p202
      %p204 = scmp.le.s32.totalorder 1, %s18
      %p205 = scmp.lt.s32.totalorder %s18, 3
      %p206 = pnand %p204, %p205
      %p207 = pneg %p206
      // Predicated region
      $region9: #{tpu_custom_call.1} parent=5 // pred_check
        _
      $region10: #{tpu_custom_call.1} parent=5 // pred_check_branch
        %209 = sbr.rel (%p206) target = $region12
      $region11: #{tpu_custom_call.1} parent=5 // pred_region
        %s210 = ssub.s32 %s18, 1
        // Predicated region
        $region13: #{tpu_custom_call.1} parent=11 // pred_check
          %p211 = pneg %p65
        $region14: #{tpu_custom_call.1} parent=11 // pred_check_branch
          %213 = sbr.rel (%p211) target = $region16
        $region15: #{tpu_custom_call.1} parent=11 // pred_region
          _
        $region16: #{tpu_custom_call.1} parent=11 // pred_fallthru
          _
        // Predicated region
        $region17: #{tpu_custom_call.1} parent=11 // pred_check
          %p214 = pneg %p86
        $region18: #{tpu_custom_call.1} parent=11 // pred_check_branch
          %216 = sbr.rel (%p214) target = $region20
        $region19: #{tpu_custom_call.1} parent=11 // pred_region
          _
        $region20: #{tpu_custom_call.1} parent=11 // pred_fallthru
          _
        // Predicated region
        $region21: #{tpu_custom_call.1} parent=11 // pred_check
          %p217 = pneg %p107
        $region22: #{tpu_custom_call.1} parent=11 // pred_check_branch
          %219 = sbr.rel (%p217) target = $region24
        $region23: #{tpu_custom_call.1} parent=11 // pred_region
          _
        $region24: #{tpu_custom_call.1} parent=11 // pred_fallthru
          _
        // Predicated region
        $region25: #{tpu_custom_call.1} parent=11 // pred_check
          %p220 = pneg %p128
        $region26: #{tpu_custom_call.1} parent=11 // pred_check_branch
          %222 = sbr.rel (%p220) target = $region28
        $region27: #{tpu_custom_call.1} parent=11 // pred_region
          _
        $region28: #{tpu_custom_call.1} parent=11 // pred_fallthru
          _
        // Predicated region
        $region29: #{tpu_custom_call.1} parent=11 // pred_check
          %p223 = pneg %p149
        $region30: #{tpu_custom_call.1} parent=11 // pred_check_branch
          %225 = sbr.rel (%p223) target = $region32
        $region31: #{tpu_custom_call.1} parent=11 // pred_region
          _
        $region32: #{tpu_custom_call.1} parent=11 // pred_fallthru
          _
        // Predicated region
        $region33: #{tpu_custom_call.1} parent=11 // pred_check
          %p226 = pneg %p170
        $region34: #{tpu_custom_call.1} parent=11 // pred_check_branch
          %228 = sbr.rel (%p226) target = $region36
        $region35: #{tpu_custom_call.1} parent=11 // pred_region
          _
        $region36: #{tpu_custom_call.1} parent=11 // pred_fallthru
          _
      $region12: #{tpu_custom_call.1} parent=5 // pred_fallthru
        _
      %p229 = scmp.lt.s32.totalorder %s18, 2
      // Predicated region
      $region37: #{tpu_custom_call.1} parent=5 // pred_check
        %p230 = pneg %p229
      $region38: #{tpu_custom_call.1} parent=5 // pred_check_branch
        %232 = sbr.rel (%p230) target = $region40
      $region39: #{tpu_custom_call.1} parent=5 // pred_region
        // Predicated region
        $region41: #{tpu_custom_call.1} parent=39 // pred_check
          %p233 = pneg %p38
        $region42: #{tpu_custom_call.1} parent=39 // pred_check_branch
          %235 = sbr.rel (%p233) target = $region44
        $region43: #{tpu_custom_call.1} parent=39 // pred_region
          %s236 = smul.u32 16, %s18
          %s237 = ssub.s32 25, %s236
          %p238 = scmp.lt.s32.totalorder %s237, 16
          %s239 = scalar_select %p238, %s237, 16
          %s240 = smul.u32 128, %s239
          %p241 = scmp.lt.s32.totalorder %s236, 24
          %s242 = scalar_select %p241, %s236, 24
          %s243 = smul.addr %s242, 8
          %s244 = scalar_lea.vmem %s0, %s243
          %s245 = smul.u32 16, %s18
          %s246 = ssub.s32 25, %s245
          %p247 = scmp.lt.s32.totalorder %s246, 16
          %s248 = scalar_select %p247, %s246, 16
          %s249 = smul.u32 128, %s248
        $region44: #{tpu_custom_call.1} parent=39 // pred_fallthru
          _
      $region40: #{tpu_custom_call.1} parent=5 // pred_fallthru
        _
      %p250 = scmp.le.s32.totalorder 1, %s18
      %p251 = scmp.lt.s32.totalorder %s18, 3
      %p252 = pnand %p250, %p251
      %p253 = pneg %p252
      // Predicated region
      $region45: #{tpu_custom_call.1} parent=5 // pred_check
        _
      $region46: #{tpu_custom_call.1} parent=5 // pred_check_branch
        %255 = sbr.rel (%p252) target = $region48
      $region47: #{tpu_custom_call.1} parent=5 // pred_region
        %s256 = ssub.s32 %s18, 1
        %s257 = smul.u32 16, %s23
        %s258 = ssub.s32 25, %s257
        %p259 = scmp.lt.s32.totalorder %s258, 16
        %s260 = scalar_select %p259, %s258, 16
        %s261 = smul.u32 128, %s260
        %p262 = scmp.lt.s32.totalorder %s257, 24
        %s263 = scalar_select %p262, %s257, 24
        %s264 = smul.addr %s263, 8
        %s265 = scalar_lea.vmem %s0, %s264
        %p266 = pneg %p44
        %p267 = pneg %p41
        %p268 = pneg %p65
        %p269 = pneg %p62
        %p270 = pneg %p86
        %p271 = pneg %p83
        %p272 = pneg %p107
        %p273 = pneg %p104
        %p274 = pneg %p128
        %p275 = pneg %p125
        %p276 = pneg %p149
        %p277 = pneg %p146
        %p278 = pneg %p170
        %p279 = pneg %p167
        %p280 = pneg %p196
        %p281 = pneg %p193
        %s282 = sand.u32 %s183, 1
        %s283 = scalar_lea.sflag [#allocation4], %s282
        %s284 = sand.u32 %s183, 1
        %s285 = scalar_lea.vmem [#allocation3], %s284
        %s286 = smul.u32 16, %s23
        %s287 = ssub.s32 25, %s286
        %p288 = scmp.lt.s32.totalorder %s287, 16
        %s289 = scalar_select %p288, %s287, 16
        %s290 = smul.u32 128, %s289
        %p291 = scmp.lt.s32.totalorder %s286, 24
        %s292 = scalar_select %p291, %s286, 24
        %s293 = smul.addr %s292, 8
        %s294 = scalar_lea.vmem %s0, %s293
        %s295 = smul.u32 16, %s23
        %s296 = ssub.s32 25, %s295
        %p297 = scmp.lt.s32.totalorder %s296, 16
        %s298 = scalar_select %p297, %s296, 16
        %s299 = smul.u32 128, %s298
        %v300 = vld [vmem:[%s294] sm:$0xff]
        %v301 = vld [vmem:[%s294 + $0x8] sm:$0xff]
        %v302 = vld [vmem:[%s294 + $0x10] sm:$0xff]
        %v303 = vld [vmem:[%s294 + $0x18] sm:$0xff]
        %v304 = vld [vmem:[%s294 + $0x20] sm:$0xff]
        %v305 = vld [vmem:[%s294 + $0x28] sm:$0xff]
        %v306 = vld [vmem:[%s294 + $0x30] sm:$0xff]
        %v307 = vld [vmem:[%s294 + $0x38] sm:$0xff]
        %v308 = vld [vmem:[%s294 + $0x40] sm:$0xff]
        %v309 = vld [vmem:[%s294 + $0x48] sm:$0xff]
        %v310 = vld [vmem:[%s294 + $0x50] sm:$0xff]
        %v311 = vld [vmem:[%s294 + $0x58] sm:$0xff]
        %v312 = vld [vmem:[%s294 + $0x60] sm:$0xff]
        %v313 = vld [vmem:[%s294 + $0x68] sm:$0xff]
        %v314 = vld [vmem:[%s294 + $0x70] sm:$0xff]
        %v315 = vld [vmem:[%s294 + $0x78] sm:$0xff]
        %v316 = vld [vmem:[%s1] sm:$0xff]
        %v317 = vld [vmem:[%s1 + $0x8] sm:$0xff]
        %v318 = vld [vmem:[%s1 + $0x10] sm:$0xff]
        %v319 = vld [vmem:[%s1 + $0x18] sm:$0xff]
        %v320 = vld [vmem:[%s2] sm:$0xff]
        %v321 = vld [vmem:[%s2 + $0x8] sm:$0xff]
        %v322 = vld [vmem:[%s2 + $0x10] sm:$0xff]
        %v323 = vld [vmem:[%s2 + $0x18] sm:$0xff]
        %325 = vset.pattern.permute.xlu0 0
        %326 = vperm.xlu0 %325, %v320
        %v327 = vpop.permute.xlu0 %326
        %330 = vset.pattern.permute.xlu0 0
        %331 = vperm.xlu0 %330, %v321
        %v332 = vpop.permute.xlu0 %331
        %335 = vset.pattern.permute.xlu0 0
        %336 = vperm.xlu0 %335, %v322
        %v337 = vpop.permute.xlu0 %336
        %340 = vset.pattern.permute.xlu0 0
        %341 = vperm.xlu0 %340, %v323
        %v342 = vpop.permute.xlu0 %341
        %vm344 = vcmask 130048
        %v346 = vsel %vm344, %v316, 0
        %v349 = vsel %vm344, %v317, 0
        %v352 = vsel %vm344, %v318, 0
        %v355 = vsel %vm344, %v319, 0
        %v358 = vsel %vm344, %v300, 0
        %v361 = vsel %vm344, %v301, 0
        %v364 = vsel %vm344, %v302, 0
        %v367 = vsel %vm344, %v303, 0
        %v370 = vsel %vm344, %v304, 0
        %v373 = vsel %vm344, %v305, 0
        %v376 = vsel %vm344, %v306, 0
        %v379 = vsel %vm344, %v307, 0
        %v382 = vsel %vm344, %v308, 0
        %v385 = vsel %vm344, %v309, 0
        %v388 = vsel %vm344, %v310, 0
        %v391 = vsel %vm344, %v311, 0
        %v394 = vsel %vm344, %v312, 0
        %v397 = vsel %vm344, %v313, 0
        %v400 = vsel %vm344, %v314, 0
        %v403 = vsel %vm344, %v315, 0
        %405 = vmatprep.subr.mxu0 0.0
        %406 = vmatpush1.xpose.msra.mxu0 %v358
        %407 = vmatprep.subr.mxu0 0.0
        %408 = vmatpush1.xpose.msra.mxu0 %v361
        %409 = vmatprep.subr.mxu0 0.0
        %410 = vmatpush1.xpose.msra.mxu0 %v364
        %411 = vmatprep.subr.mxu0 0.0
        %412 = vmatpush1.xpose.msra.mxu0 %v367
        %413 = vmatprep.subr.mxu0 0.0
        %414 = vmatpush1.xpose.msra.mxu0 %v370
        %415 = vmatprep.subr.mxu0 0.0
        %416 = vmatpush1.xpose.msra.mxu0 %v373
        %417 = vmatprep.subr.mxu0 0.0
        %418 = vmatpush1.xpose.msra.mxu0 %v376
        %419 = vmatprep.subr.mxu0 0.0
        %420 = vmatpush1.xpose.msra.mxu0 %v379
        %421 = vmatprep.subr.mxu0 0.0
        %422 = vmatpush1.xpose.msra.mxu0 %v382
        %423 = vmatprep.subr.mxu0 0.0
        %424 = vmatpush1.xpose.msra.mxu0 %v385
        %425 = vmatprep.subr.mxu0 0.0
        %426 = vmatpush1.xpose.msra.mxu0 %v388
        %427 = vmatprep.subr.mxu0 0.0
        %428 = vmatpush1.xpose.msra.mxu0 %v391
        %429 = vmatprep.subr.mxu0 0.0
        %430 = vmatpush1.xpose.msra.mxu0 %v394
        %431 = vmatprep.subr.mxu0 0.0
        %432 = vmatpush1.xpose.msra.mxu0 %v397
        %433 = vmatprep.subr.mxu0 0.0
        %434 = vmatpush1.xpose.msra.mxu0 %v400
        %435 = vmatprep.subr.mxu0 0.0
        %436 = vmatpush1.xpose.msra.mxu0 %v403
        %437 = vmatprep.subr.mxu0 0.0
        %438 = vmatpush1.xpose.msra.mxu0 0.0
        %439 = vmatprep.subr.mxu0 0.0
        %440 = vmatpush1.xpose.msra.mxu0 0.0
        %441 = vmatprep.subr.mxu0 0.0
        %442 = vmatpush1.xpose.msra.mxu0 0.0
        %443 = vmatprep.subr.mxu0 0.0
        %444 = vmatpush1.xpose.msra.mxu0 0.0
        %445 = vmatprep.subr.mxu0 0.0
        %446 = vmatpush1.xpose.msra.mxu0 0.0
        %447 = vmatprep.subr.mxu0 0.0
        %448 = vmatpush1.xpose.msra.mxu0 0.0
        %449 = vmatprep.subr.mxu0 0.0
        %450 = vmatpush1.xpose.msra.mxu0 0.0
        %451 = vmatprep.subr.mxu0 0.0
        %452 = vmatpush1.xpose.msra.mxu0 0.0
        %453 = vmatprep.subr.mxu0 0.0
        %454 = vmatpush1.xpose.msra.mxu0 0.0
        %455 = vmatprep.subr.mxu0 0.0
        %456 = vmatpush1.xpose.msra.mxu0 0.0
        %457 = vmatprep.subr.mxu0 0.0
        %458 = vmatpush1.xpose.msra.mxu0 0.0
        %459 = vmatprep.subr.mxu0 0.0
        %460 = vmatpush1.xpose.msra.mxu0 0.0
        %461 = vmatprep.subr.mxu0 0.0
        %462 = vmatpush1.xpose.msra.mxu0 0.0
        %463 = vmatprep.subr.mxu0 0.0
        %464 = vmatpush1.xpose.msra.mxu0 0.0
        %465 = vmatprep.subr.mxu0 0.0
        %466 = vmatpush1.xpose.msra.mxu0 0.0
        %467 = vmatprep.subr.mxu0 0.0
        %468 = vmatpush1.xpose.msra.mxu0 0.0
        %469 = vmatprep.mubr.f32.mxu0 0.0
        %470 = vmatmul.mubr.f32.gmra.mrb[0].mxu0 %v346
        %v471 = vpop.f32.mrb[0].mxu0
        %v472 = vadd.f32 %v327, %v471
        %v473 = vpop.f32.mrb[0].mxu0
        %474 = vmatprep.mubr.f32.mxu0 0.0
        %475 = vmatmul.mubr.f32.gmra.mrb[0].mxu0 %v349
        %v476 = vpop.f32.mrb[0].mxu0
        %v477 = vadd.f32 %v332, %v476
        %v478 = vpop.f32.mrb[0].mxu0
        %479 = vmatprep.mubr.f32.mxu0 0.0
        %480 = vmatmul.mubr.f32.gmra.mrb[0].mxu0 %v352
        %v481 = vpop.f32.mrb[0].mxu0
        %v482 = vadd.f32 %v337, %v481
        %v483 = vpop.f32.mrb[0].mxu0
        %484 = vmatprep.mubr.f32.mxu0 0.0
        %485 = vmatmul.mubr.f32.gmra.mrb[0].mxu0 %v355
        %v486 = vpop.f32.mrb[0].mxu0
        %v487 = vadd.f32 %v342, %v486
        %v488 = vpop.f32.mrb[0].mxu0
        %489 = vdwg.mxu0
        %v490 = vtanh.pop %v472
        %v491 = vtanh.pop %v477
        %v492 = vtanh.pop %v482
        %v493 = vtanh.pop %v487
        %v494 = vld [vmem:[%s3] sm:$0xff]
        %v495 = vld [vmem:[%s3 + $0x8] sm:$0xff]
        %v496 = vld [vmem:[%s3 + $0x10] sm:$0xff]
        %v497 = vld [vmem:[%s3 + $0x18] sm:$0xff]
        %v498 = vld [vmem:[%s4] sm:$0xff]
        %v499 = vld [vmem:[%s4 + $0x8] sm:$0xff]
        %v500 = vld [vmem:[%s4 + $0x10] sm:$0xff]
        %v501 = vld [vmem:[%s4 + $0x18] sm:$0xff]
        %503 = vset.pattern.permute.xlu0 0
        %504 = vperm.xlu0 %503, %v498
        %v505 = vpop.permute.xlu0 %504
        %508 = vset.pattern.permute.xlu0 0
        %509 = vperm.xlu0 %508, %v499
        %v510 = vpop.permute.xlu0 %509
        %513 = vset.pattern.permute.xlu0 0
        %514 = vperm.xlu0 %513, %v500
        %v515 = vpop.permute.xlu0 %514
        %518 = vset.pattern.permute.xlu0 0
        %519 = vperm.xlu0 %518, %v501
        %v520 = vpop.permute.xlu0 %519
        %vm522 = vcmask 261120
        %v524 = vsel %vm522, %v494, 0
        %v527 = vsel %vm522, %v495, 0
        %v530 = vsel %vm522, %v496, 0
        %v533 = vsel %vm522, %v497, 0
        %535 = vmatprep.subr.mxu0 0.0
        %536 = vmatpush1.msra.mxu0 %v490
        %537 = vmatprep.subr.mxu0 0.0
        %538 = vmatpush1.msra.mxu0 %v491
        %539 = vmatprep.subr.mxu0 0.0
        %540 = vmatpush1.msra.mxu0 %v492
        %541 = vmatprep.subr.mxu0 0.0
        %542 = vmatpush1.msra.mxu0 %v493
        %543 = vmatprep.subr.mxu0 0.0
        %544 = vmatpush1.msra.mxu0 0.0
        %545 = vmatprep.subr.mxu0 0.0
        %546 = vmatpush1.msra.mxu0 0.0
        %547 = vmatprep.subr.mxu0 0.0
        %548 = vmatpush1.msra.mxu0 0.0
        %549 = vmatprep.subr.mxu0 0.0
        %550 = vmatpush1.msra.mxu0 0.0
        %551 = vmatprep.subr.mxu0 0.0
        %552 = vmatpush1.msra.mxu0 0.0
        %553 = vmatprep.subr.mxu0 0.0
        %554 = vmatpush1.msra.mxu0 0.0
        %555 = vmatprep.subr.mxu0 0.0
        %556 = vmatpush1.msra.mxu0 0.0
        %557 = vmatprep.subr.mxu0 0.0
        %558 = vmatpush1.msra.mxu0 0.0
        %559 = vmatprep.subr.mxu0 0.0
        %560 = vmatpush1.msra.mxu0 0.0
        %561 = vmatprep.subr.mxu0 0.0
        %562 = vmatpush1.msra.mxu0 0.0
        %563 = vmatprep.subr.mxu0 0.0
        %564 = vmatpush1.msra.mxu0 0.0
        %565 = vmatprep.subr.mxu0 0.0
        %566 = vmatpush1.msra.mxu0 0.0
        %567 = vmatprep.subr.mxu0 0.0
        %568 = vmatpush1.msra.mxu0 0.0
        %569 = vmatprep.subr.mxu0 0.0
        %570 = vmatpush1.msra.mxu0 0.0
        %571 = vmatprep.subr.mxu0 0.0
        %572 = vmatpush1.msra.mxu0 0.0
        %573 = vmatprep.subr.mxu0 0.0
        %574 = vmatpush1.msra.mxu0 0.0
        %575 = vmatprep.subr.mxu0 0.0
        %576 = vmatpush1.msra.mxu0 0.0
        %577 = vmatprep.subr.mxu0 0.0
        %578 = vmatpush1.msra.mxu0 0.0
        %579 = vmatprep.subr.mxu0 0.0
        %580 = vmatpush1.msra.mxu0 0.0
        %581 = vmatprep.subr.mxu0 0.0
        %582 = vmatpush1.msra.mxu0 0.0
        %583 = vmatprep.subr.mxu0 0.0
        %584 = vmatpush1.msra.mxu0 0.0
        %585 = vmatprep.subr.mxu0 0.0
        %586 = vmatpush1.msra.mxu0 0.0
        %587 = vmatprep.subr.mxu0 0.0
        %588 = vmatpush1.msra.mxu0 0.0
        %589 = vmatprep.subr.mxu0 0.0
        %590 = vmatpush1.msra.mxu0 0.0
        %591 = vmatprep.subr.mxu0 0.0
        %592 = vmatpush1.msra.mxu0 0.0
        %593 = vmatprep.subr.mxu0 0.0
        %594 = vmatpush1.msra.mxu0 0.0
        %595 = vmatprep.subr.mxu0 0.0
        %596 = vmatpush1.msra.mxu0 0.0
        %597 = vmatprep.subr.mxu0 0.0
        %598 = vmatpush1.msra.mxu0 0.0
        %599 = vmatprep.mubr.f32.mxu0 0.0
        %600 = vmatmul.mubr.f32.gmra.mrb[0].mxu0 %v524
        %v601 = vpop.f32.mrb[0].mxu0
        %v602 = vadd.f32 %v505, %v601
        %v603 = vpop.f32.mrb[0].mxu0
        %604 = vmatprep.mubr.f32.mxu0 0.0
        %605 = vmatmul.mubr.f32.gmra.mrb[0].mxu0 %v527
        %v606 = vpop.f32.mrb[0].mxu0
        %v607 = vadd.f32 %v510, %v606
        %v608 = vpop.f32.mrb[0].mxu0
        %609 = vmatprep.mubr.f32.mxu0 0.0
        %610 = vmatmul.mubr.f32.gmra.mrb[0].mxu0 %v530
        %v611 = vpop.f32.mrb[0].mxu0
        %v612 = vadd.f32 %v515, %v611
        %v613 = vpop.f32.mrb[0].mxu0
        %614 = vmatprep.mubr.f32.mxu0 0.0
        %615 = vmatmul.mubr.f32.gmra.mrb[0].mxu0 %v533
        %v616 = vpop.f32.mrb[0].mxu0
        %v617 = vadd.f32 %v520, %v616
        %v618 = vpop.f32.mrb[0].mxu0
        %619 = vdwg.mxu0
        %v620 = vtanh.pop %v602
        %v621 = vtanh.pop %v607
        %v622 = vtanh.pop %v612
        %v623 = vtanh.pop %v617
        %v624 = vld [vmem:[%s5] sm:$0x1]
        %v625 = vld [vmem:[#allocation2] sm:$0x1]
        %627 = vset.pattern.permute.xlu0 0
        %628 = vperm.xlu0 %627, %v625
        %v629 = vpop.permute.xlu0 %628
        %v631 = vlaneseq
        %v632 = vshrl.u32 %v631, 7
        %v633 = vsub.s32 0, %v632
        %v634 = vrot.slane %v629, %v633
        %v636 = vsel %vm522, %v624, 0
        %638 = vmatprep.subr.mxu0 0.0
        %639 = vmatpush1.msra.mxu0 %v620
        %640 = vmatprep.subr.mxu0 0.0
        %641 = vmatpush1.msra.mxu0 %v621
        %642 = vmatprep.subr.mxu0 0.0
        %643 = vmatpush1.msra.mxu0 %v622
        %644 = vmatprep.subr.mxu0 0.0
        %645 = vmatpush1.msra.mxu0 %v623
        %646 = vmatprep.subr.mxu0 0.0
        %647 = vmatpush1.msra.mxu0 0.0
        %648 = vmatprep.subr.mxu0 0.0
        %649 = vmatpush1.msra.mxu0 0.0
        %650 = vmatprep.subr.mxu0 0.0
        %651 = vmatpush1.msra.mxu0 0.0
        %652 = vmatprep.subr.mxu0 0.0
        %653 = vmatpush1.msra.mxu0 0.0
        %654 = vmatprep.subr.mxu0 0.0
        %655 = vmatpush1.msra.mxu0 0.0
        %656 = vmatprep.subr.mxu0 0.0
        %657 = vmatpush1.msra.mxu0 0.0
        %658 = vmatprep.subr.mxu0 0.0
        %659 = vmatpush1.msra.mxu0 0.0
        %660 = vmatprep.subr.mxu0 0.0
        %661 = vmatpush1.msra.mxu0 0.0
        %662 = vmatprep.subr.mxu0 0.0
        %663 = vmatpush1.msra.mxu0 0.0
        %664 = vmatprep.subr.mxu0 0.0
        %665 = vmatpush1.msra.mxu0 0.0
        %666 = vmatprep.subr.mxu0 0.0
        %667 = vmatpush1.msra.mxu0 0.0
        %668 = vmatprep.subr.mxu0 0.0
        %669 = vmatpush1.msra.mxu0 0.0
        %670 = vmatprep.subr.mxu0 0.0
        %671 = vmatpush1.msra.mxu0 0.0
        %672 = vmatprep.subr.mxu0 0.0
        %673 = vmatpush1.msra.mxu0 0.0
        %674 = vmatprep.subr.mxu0 0.0
        %675 = vmatpush1.msra.mxu0 0.0
        %676 = vmatprep.subr.mxu0 0.0
        %677 = vmatpush1.msra.mxu0 0.0
        %678 = vmatprep.subr.mxu0 0.0
        %679 = vmatpush1.msra.mxu0 0.0
        %680 = vmatprep.subr.mxu0 0.0
        %681 = vmatpush1.msra.mxu0 0.0
        %682 = vmatprep.subr.mxu0 0.0
        %683 = vmatpush1.msra.mxu0 0.0
        %684 = vmatprep.subr.mxu0 0.0
        %685 = vmatpush1.msra.mxu0 0.0
        %686 = vmatprep.subr.mxu0 0.0
        %687 = vmatpush1.msra.mxu0 0.0
        %688 = vmatprep.subr.mxu0 0.0
        %689 = vmatpush1.msra.mxu0 0.0
        %690 = vmatprep.subr.mxu0 0.0
        %691 = vmatpush1.msra.mxu0 0.0
        %692 = vmatprep.subr.mxu0 0.0
        %693 = vmatpush1.msra.mxu0 0.0
        %694 = vmatprep.subr.mxu0 0.0
        %695 = vmatpush1.msra.mxu0 0.0
        %696 = vmatprep.subr.mxu0 0.0
        %697 = vmatpush1.msra.mxu0 0.0
        %698 = vmatprep.subr.mxu0 0.0
        %699 = vmatpush1.msra.mxu0 0.0
        %700 = vmatprep.subr.mxu0 0.0
        %701 = vmatpush1.msra.mxu0 0.0
        %702 = vmatprep.mubr.f32.mxu0 0.0
        %703 = vmatmul.mubr.f32.gmra.mrb[0].mxu0 %v636
        %v704 = vpop.f32.mrb[0].mxu0
        %v705 = vadd.f32 %v634, %v704
        %v706 = vpop.f32.mrb[0].mxu0
        %707 = vdwg.mxu0
        %708 = vst [vmem:[%s285] sm:$0x1] %v705
        %s709 = sand.u32 %s183, 1
        %s710 = scalar_lea.sflag [#allocation4], %s709
        %s711 = sand.u32 %s183, 1
        %s712 = scalar_lea.vmem [#allocation3], %s711
        // Predicated region
        $region49: #{tpu_custom_call.1} parent=47 // pred_check
          %p713 = pneg %p193
        $region50: #{tpu_custom_call.1} parent=47 // pred_check_branch
          %715 = sbr.rel (%p713) target = $region52
        $region51: #{tpu_custom_call.1} parent=47 // pred_region
          %s717 = ssub.s32 16, 16
          %718 = vsyncadd %s710, %s717
          %s719 = smul.addr %s23, 16
          %s720 = scalar_lea.hbm %s7, %s719
          %s722 = sshll.u32 %s712, 4
          %s723 = int_to_ptr.vmem [resolvable:$true] %s722
          %725 = dma.vmem_to_hbm [thread:$0]  %s723, 16, %s720, %s710
        $region52: #{tpu_custom_call.1} parent=47 // pred_fallthru
          _
      $region48: #{tpu_custom_call.1} parent=5 // pred_fallthru
        _
      %p726 = scmp.le.s32.totalorder 2, %s18
      // Predicated region
      $region53: #{tpu_custom_call.1} parent=5 // pred_check
        %p727 = pneg %p726
      $region54: #{tpu_custom_call.1} parent=5 // pred_check_branch
        %729 = sbr.rel (%p727) target = $region56
      $region55: #{tpu_custom_call.1} parent=5 // pred_region
        %s730 = ssub.s32 %s18, 2
        // Predicated region
        $region57: #{tpu_custom_call.1} parent=55 // pred_check
          %p731 = pneg %p199
        $region58: #{tpu_custom_call.1} parent=55 // pred_check_branch
          %733 = sbr.rel (%p731) target = $region60
        $region59: #{tpu_custom_call.1} parent=55 // pred_region
          %s734 = sand.u32 %s184, 1
          %s735 = scalar_lea.sflag [#allocation4], %s734
          %s736 = sand.u32 %s184, 1
          %s737 = scalar_lea.vmem [#allocation3], %s736
          %738 = dma.done %s735, 16
        $region60: #{tpu_custom_call.1} parent=55 // pred_fallthru
          _
      $region56: #{tpu_custom_call.1} parent=5 // pred_fallthru
        _
    $region6: #{tpu_custom_call.1} parent=1 // loop_footer
      %s22 = sadd.s32 1, %s18
    $region7: #{tpu_custom_call.1} parent=1 // loop_footer_branch
      %17 = sbr.rel target = $region3
    $region8: #{tpu_custom_call.1} parent=1 // loop_exit
      _
    %739 = vsyncpa [#allocation4], 1
    %s740 = scalar_lea.sflag [#allocation4], 1
    %741 = vsyncpa %s740, 1

</llo_original>
